<compile_context>
chip_gen: v5e
topology: v5e:2x2
jax: 0.10.0
libtpu: 0.0.40
codegen_flags: <defaults>
</compile_context>

<pallas_src>
import functools

import jax
import jax.numpy as jnp
from jax.experimental import pallas as pl
from jax.experimental.pallas import tpu as pltpu


def _attention_pooling_kernel(x_ref, w_ref, o_ref, m_sc, l_sc, acc_sc, *, seq_len):
    # x_ref:   (B_TILE, T_TILE, D)   in VMEM
    # w_ref:   (1, D)                in VMEM (shared projection vector)
    # o_ref:   (B_TILE, 1, D)        output block (resident across the T axis)
    # m_sc, l_sc: (B_TILE, 1, 1) f32 scratch (running max / running denom)
    # acc_sc:     (B_TILE, 1, D) f32 scratch (running weighted sum)
    kt = pl.program_id(1)
    nt = pl.num_programs(1)

    @pl.when(kt == 0)
    def _():
        m_sc[...] = jnp.full(m_sc.shape, -jnp.inf, dtype=m_sc.dtype)
        l_sc[...] = jnp.zeros(l_sc.shape, dtype=l_sc.dtype)
        acc_sc[...] = jnp.zeros(acc_sc.shape, dtype=acc_sc.dtype)

    x = x_ref[...]                                  # (BT, TT, D)
    bt, tt, d = x.shape
    has_tail = (seq_len % tt) != 0                  # static Python check

    # Shared projection vector as a per-batch length-1 "query": (BT, 1, D).
    # (The size-1 M dim is inherent to an MXU-based score projection: the
    #  Linear(D -> 1) weight is a single row.)
    q = jnp.broadcast_to(w_ref[...].reshape(1, 1, d), (bt, 1, d)).astype(x.dtype)

    # Scores on the MXU: (BT, 1, TT), accumulated in f32 (matches `.float()`).
    # NOTE: no bias add — softmax is shift-invariant, so the Linear bias is a
    # no-op on the pooled output and is dropped entirely.
    s = jnp.einsum('bqd,bkd->bqk', q, x, preferred_element_type=jnp.float32)

    if has_tail:
        # Cheap tail masking on the score row: padded columns -> -inf so
        # exp() gives exactly 0 weight.
        c_idx = jax.lax.broadcasted_iota(jnp.int32, (1, 1, tt), 2)
        col_valid = (kt * tt + c_idx) < seq_len
        s = jnp.where(col_valid, s, -jnp.inf)
        # Zero padded x rows before the weighted-sum matmul: stale block
        # padding can decode to NaN/Inf and 0 * NaN would poison acc.  This
        # full-tile select exists only when T % t_tile != 0 and its VPU cost
        # (~0.5 us for an 8 MiB tile) stays hidden under the x-block DMA.
        r_idx = jax.lax.broadcasted_iota(jnp.int32, (1, tt, 1), 1)
        row_valid = (kt * tt + r_idx) < seq_len
        x = jnp.where(row_valid, x, jnp.zeros_like(x))

    # Online (flash-style) softmax update over the T axis.
    m_prev = m_sc[...]                                              # (BT,1,1)
    m_new = jnp.maximum(m_prev, jnp.max(s, axis=-1, keepdims=True))
    alpha = jnp.exp(m_prev - m_new)
    p = jnp.exp(s - m_new)                                          # (BT,1,TT)

    l_sc[...] = alpha * l_sc[...] + jnp.sum(p, axis=-1, keepdims=True)
    # Weighted reduction over T on the MXU: (BT,1,TT) @ (BT,TT,D) -> (BT,1,D).
    # p is cast to x.dtype (bf16 weights when x is bf16 — standard flash
    # practice; accumulation stays f32).  For f32 x this is a no-op.
    acc_sc[...] = alpha * acc_sc[...] + jnp.einsum(
        'bqk,bkd->bqd', p.astype(x.dtype), x,
        preferred_element_type=jnp.float32)
    m_sc[...] = m_new

    @pl.when(kt == nt - 1)
    def _():
        o_ref[...] = (acc_sc[...] / l_sc[...]).astype(o_ref.dtype)


def _vmem_capacity_bytes():
    """Best-effort physical VMEM size; conservative (v7x, 64 MiB) fallback."""
    try:
        info = pltpu.get_tpu_info()
        for attr in ("vmem_capacity_bytes", "vmem_size_bytes", "vmem_bytes"):
            cap = getattr(info, attr, None)
            if cap:
                return int(cap)
    except Exception:
        pass
    return 64 * 1024 * 1024


def _choose_tiles(batch, seq, dim, itemsize):
    """Pick (b_tile, t_tile, vmem_limit_bytes) per chip generation."""
    # Keep the "parallel" B grid axis >= 2 steps so v7x's two TensorCores
    # both get work (harmless on single-core chips).
    if batch >= 16:
        b_tile = 8
    elif batch > 1:
        b_tile = max(1, pl.cdiv(batch, 2))
    else:
        b_tile = 1

    vmem_cap = _vmem_capacity_bytes()
    if vmem_cap >= 100 * 1024 * 1024:
        # v5e / v6e: 128 MiB physical VMEM -> big blocks, 64 MiB scoped limit.
        budget_bytes = 12 * 1024 * 1024
        vmem_limit = 64 * 1024 * 1024
    else:
        # v7x: 64 MiB physical VMEM -> ~8 MiB blocks (x2 double-buffered),
        # scoped limit <= 48 MiB leaves headroom for scratch + output.
        budget_bytes = 8 * 1024 * 1024
        vmem_limit = 48 * 1024 * 1024

    t_tile = budget_bytes // max(1, b_tile * dim * itemsize)
    # If D is enormous, shrink b_tile before letting the block blow the budget.
    while b_tile > 1 and t_tile < 128:
        b_tile = max(1, b_tile // 2)
        t_tile = budget_bytes // max(1, b_tile * dim * itemsize)

    # Lane / MXU alignment: multiple of 128 (fall back to 8 for huge D).
    if t_tile >= 128:
        t_tile = (t_tile // 128) * 128
    else:
        t_tile = max(8, (t_tile // 8) * 8)
    if t_tile >= seq:
        t_tile = seq                      # single T tile; full-dim block is legal
    return b_tile, t_tile, vmem_limit


def attention_pooling(x, w, b=None, *, b_tile=None, t_tile=None):
    """AttentionPooling forward.

    Args:
      x: [B, T, D] input.
      w: [1, D] (or [D]) weight of nn.Linear(D, 1) (PyTorch layout).
      b: bias of nn.Linear(D, 1).  Accepted for API parity but IGNORED:
         softmax is shift-invariant, so a scalar bias on the logits cannot
         change the pooled output.
    Returns:
      [B, D] float32 pooled output.
    """
    del b  # exact: softmax shift-invariance
    B, T, D = x.shape
    itemsize = jnp.dtype(x.dtype).itemsize
    auto_b, auto_t, vmem_limit = _choose_tiles(B, T, D, itemsize)
    b_tile = min(b_tile or auto_b, B)
    t_tile = min(t_tile or auto_t, T)

    grid = (pl.cdiv(B, b_tile), pl.cdiv(T, t_tile))
    kernel = functools.partial(_attention_pooling_kernel, seq_len=T)
    w2 = w.reshape(1, D)

    cost = pl.CostEstimate(
        flops=4 * B * T * D,                                   # two matmul passes
        transcendentals=B * T,                                 # the exps
        bytes_accessed=B * T * D * itemsize + B * D * 4 + D * itemsize,
    )

    out = pl.pallas_call(
        kernel,
        out_shape=jax.ShapeDtypeStruct((B, 1, D), jnp.float32),
        grid_spec=pltpu.PrefetchScalarGridSpec(
            num_scalar_prefetch=0,
            grid=grid,
            in_specs=[
                pl.BlockSpec((b_tile, t_tile, D), lambda bi, kt: (bi, kt, 0)),
                pl.BlockSpec((1, D), lambda bi, kt: (0, 0)),
            ],
            # Output block is resident across the T axis (accumulator pattern);
            # written once per B tile under pl.when(kt == last).  The final
            # (B, 1, D) -> (B, D) reshape happens outside (free in XLA); an
            # in-kernel squeeze would add a per-B-tile relayout for no
            # measurable gain on a once-per-tile 16 KiB store.
            out_specs=pl.BlockSpec((b_tile, 1, D), lambda bi, kt: (bi, 0, 0)),
            scratch_shapes=[
                pltpu.VMEM((b_tile, 1, 1), jnp.float32),   # running max
                pltpu.VMEM((b_tile, 1, 1), jnp.float32),   # running denom
                pltpu.VMEM((b_tile, 1, D), jnp.float32),   # running weighted sum
            ],
        ),
        compiler_params=pltpu.CompilerParams(
            dimension_semantics=("parallel", "arbitrary"),
            vmem_limit_bytes=vmem_limit,
        ),
        cost_estimate=cost,
    )(x, w2)
    return out.reshape(B, D)


def _reference(x, w, b):
    # Full PyTorch semantics, INCLUDING the bias, to validate that dropping it
    # in the kernel (softmax shift-invariance) is exact.
    scores = jnp.einsum('btd,od->bto', x, w)[..., 0].astype(jnp.float32) + b[0, 0]
    weights = jax.nn.softmax(scores, axis=-1)[..., None]
    return jnp.sum(x.astype(jnp.float32) * weights, axis=1)


if __name__ == "__main__":
    key = jax.random.PRNGKey(0)
    k1, k2, k3, k4, k5 = jax.random.split(key, 5)

    # Case 1: small shape implied by the module (batch of sequences).
    B, T, D = 2, 8, 32
    x = jax.random.normal(k1, (B, T, D), dtype=jnp.float32)
    w = jax.random.normal(k2, (1, D), dtype=jnp.float32) / jnp.sqrt(jnp.float32(D))
    b = jax.random.normal(k3, (1, 1), dtype=jnp.float32) * 0.1

    out = jax.block_until_ready(attention_pooling(x, w, b))
    ref = _reference(x, w, b)
    assert out.shape == (B, D)
    assert jnp.allclose(out, ref, atol=5e-5, rtol=5e-5), "case 1 mismatch"

    # Case 2: exercise T-tiling, online softmax, tail masking (T % tile != 0),
    # and a partial B tile (B=3 with b_tile=cdiv(3,2)=2).
    B2, T2, D2 = 3, 20, 128
    x2 = jax.random.normal(k4, (B2, T2, D2), dtype=jnp.float32)
    w2 = jax.random.normal(k5, (1, D2), dtype=jnp.float32) / jnp.sqrt(jnp.float32(D2))
    b2 = b

    out2 = jax.block_until_ready(attention_pooling(x2, w2, b2, t_tile=8))
    ref2 = _reference(x2, w2, b2)
    assert out2.shape == (B2, D2)
    assert jnp.allclose(out2, ref2, atol=5e-5, rtol=5e-5), "case 2 mismatch"

    print("KERNEL_OK")
</pallas_src>

<mosaic_0001>
module attributes {stable_mosaic.version = 11 : i64} {
  func.func @_attention_pooling_kernel(%arg0: i32, %arg1: i32, %arg2: memref<1x8x32xf32, #tpu.memory_space<vmem>>, %arg3: memref<1x32xf32, #tpu.memory_space<vmem>>, %arg4: memref<1x1x32xf32, #tpu.memory_space<vmem>>, %arg5: memref<1x1x1xf32, #tpu.memory_space<vmem>>, %arg6: memref<1x1x1xf32, #tpu.memory_space<vmem>>, %arg7: memref<1x1x32xf32, #tpu.memory_space<vmem>>) attributes {dimension_semantics = [#tpu.dimension_semantics<parallel>, #tpu.dimension_semantics<arbitrary>], iteration_bounds = array<i64: 2, 1>, scalar_prefetch = 0 : i64, scratch_operands = 3 : i64, tpu.core_type = #tpu.core_type<tc>, window_params = [{transform_indices = @transform_0, window_bounds = array<i64: 1, 8, 32>}, {pipeline_mode = #tpu.pipeline_mode<synchronous>, transform_indices = @transform_1, window_bounds = array<i64: 1, 32>}, {transform_indices = @transform_2, window_bounds = array<i64: 1, 1, 32>}]} {
    %c0_i32 = arith.constant 0 : i32
    %0 = arith.cmpi eq, %arg1, %c0_i32 : i32
    %1 = arith.extui %0 : i1 to i32
    %c0_i32_0 = arith.constant 0 : i32
    %2 = arith.cmpi ne, %1, %c0_i32_0 : i32
    scf.if %2 {
      %cst_28 = arith.constant 0xFF800000 : f32
      %32 = vector.broadcast %cst_28 : f32 to vector<1x1x1xf32>
      %c0_29 = arith.constant 0 : index
      %c0_30 = arith.constant 0 : index
      %c0_31 = arith.constant 0 : index
      %33 = vector.load %arg5[%c0_29, %c0_30, %c0_31] : memref<1x1x1xf32, #tpu.memory_space<vmem>>, vector<1x1x1xf32>
      tpu.vector_store %arg5[%c0_29, %c0_30, %c0_31], %32 {strides = array<i32>} : memref<1x1x1xf32, #tpu.memory_space<vmem>>, vector<1x1x1xf32>,
      %cst_32 = arith.constant 0.000000e+00 : f32
      %34 = vector.broadcast %cst_32 : f32 to vector<1x1x1xf32>
      %c0_33 = arith.constant 0 : index
      %c0_34 = arith.constant 0 : index
      %c0_35 = arith.constant 0 : index
      %35 = vector.load %arg6[%c0_33, %c0_34, %c0_35] : memref<1x1x1xf32, #tpu.memory_space<vmem>>, vector<1x1x1xf32>
      tpu.vector_store %arg6[%c0_33, %c0_34, %c0_35], %34 {strides = array<i32>} : memref<1x1x1xf32, #tpu.memory_space<vmem>>, vector<1x1x1xf32>,
      %cst_36 = arith.constant 0.000000e+00 : f32
      %36 = vector.broadcast %cst_36 : f32 to vector<1x1x32xf32>
      %c0_37 = arith.constant 0 : index
      %c0_38 = arith.constant 0 : index
      %c0_39 = arith.constant 0 : index
      %37 = vector.load %arg7[%c0_37, %c0_38, %c0_39] : memref<1x1x32xf32, #tpu.memory_space<vmem>>, vector<1x1x32xf32>
      tpu.vector_store %arg7[%c0_37, %c0_38, %c0_39], %36 {strides = array<i32>} : memref<1x1x32xf32, #tpu.memory_space<vmem>>, vector<1x1x32xf32>,
    } else {
    }
    %c0 = arith.constant 0 : index
    %c0_1 = arith.constant 0 : index
    %c0_2 = arith.constant 0 : index
    %3 = vector.load %arg2[%c0, %c0_1, %c0_2] : memref<1x8x32xf32, #tpu.memory_space<vmem>>, vector<1x8x32xf32>
    %c0_3 = arith.constant 0 : index
    %c0_4 = arith.constant 0 : index
    %4 = vector.load %arg3[%c0_3, %c0_4] : memref<1x32xf32, #tpu.memory_space<vmem>>, vector<1x32xf32>
    %5 = vector.shape_cast %4 : vector<1x32xf32> to vector<1x1x32xf32>
    "tpu.trace_start"() <{level = 10 : i32, message = "bqd,bkd->bqk"}> : () -> ()
    %cst = arith.constant dense<0.000000e+00> : vector<1x1x8xf32>
    %6 = tpu.matmul %5, %3, %cst {dimension_numbers = #tpu.dot_dimension_numbers<[2], [2], [1], [1], [0, 0, 0, 1, 1, 1], [0], [0]>} : vector<1x1x32xf32>, vector<1x8x32xf32>, vector<1x1x8xf32> -> vector<1x1x8xf32>
    "tpu.trace_stop"() : () -> ()
    %c0_5 = arith.constant 0 : index
    %c0_6 = arith.constant 0 : index
    %c0_7 = arith.constant 0 : index
    %7 = vector.load %arg5[%c0_5, %c0_6, %c0_7] : memref<1x1x1xf32, #tpu.memory_space<vmem>>, vector<1x1x1xf32>
    %cst_8 = arith.constant dense<0xFF800000> : vector<1x1xf32>
    %8 = vector.multi_reduction <maximumf>, %6, %cst_8 [2] : vector<1x1x8xf32> to vector<1x1xf32>
    %9 = vector.shape_cast %8 : vector<1x1xf32> to vector<1x1x1xf32>
    %10 = arith.maximumf %7, %9 : vector<1x1x1xf32>
    %11 = arith.subf %7, %10 : vector<1x1x1xf32>
    %12 = math.exp %11 : vector<1x1x1xf32>
    %13 = vector.broadcast %10 : vector<1x1x1xf32> to vector<1x1x8xf32>
    %14 = arith.subf %6, %13 : vector<1x1x8xf32>
    %15 = math.exp %14 : vector<1x1x8xf32>
    %c0_9 = arith.constant 0 : index
    %c0_10 = arith.constant 0 : index
    %c0_11 = arith.constant 0 : index
    %16 = vector.load %arg6[%c0_9, %c0_10, %c0_11] : memref<1x1x1xf32, #tpu.memory_space<vmem>>, vector<1x1x1xf32>
    %17 = arith.mulf %12, %16 : vector<1x1x1xf32>
    %cst_12 = arith.constant dense<0.000000e+00> : vector<1x1xf32>
    %18 = vector.multi_reduction <add>, %15, %cst_12 [2] : vector<1x1x8xf32> to vector<1x1xf32>
    %19 = vector.shape_cast %18 : vector<1x1xf32> to vector<1x1x1xf32>
    %20 = arith.addf %17, %19 : vector<1x1x1xf32>
    %c0_13 = arith.constant 0 : index
    %c0_14 = arith.constant 0 : index
    %c0_15 = arith.constant 0 : index
    %21 = vector.load %arg6[%c0_13, %c0_14, %c0_15] : memref<1x1x1xf32, #tpu.memory_space<vmem>>, vector<1x1x1xf32>
    tpu.vector_store %arg6[%c0_13, %c0_14, %c0_15], %20 {strides = array<i32>} : memref<1x1x1xf32, #tpu.memory_space<vmem>>, vector<1x1x1xf32>,
    %c0_16 = arith.constant 0 : index
    %c0_17 = arith.constant 0 : index
    %c0_18 = arith.constant 0 : index
    %22 = vector.load %arg7[%c0_16, %c0_17, %c0_18] : memref<1x1x32xf32, #tpu.memory_space<vmem>>, vector<1x1x32xf32>
    %23 = vector.broadcast %12 : vector<1x1x1xf32> to vector<1x1x32xf32>
    %24 = arith.mulf %23, %22 : vector<1x1x32xf32>
    "tpu.trace_start"() <{level = 10 : i32, message = "bqk,bkd->bqd"}> : () -> ()
    %cst_19 = arith.constant dense<0.000000e+00> : vector<1x1x32xf32>
    %25 = tpu.matmul %15, %3, %cst_19 {dimension_numbers = #tpu.dot_dimension_numbers<[2], [1], [1], [2], [0, 0, 0, 1, 1, 2], [0], [0]>} : vector<1x1x8xf32>, vector<1x8x32xf32>, vector<1x1x32xf32> -> vector<1x1x32xf32>
    "tpu.trace_stop"() : () -> ()
    %26 = arith.addf %24, %25 : vector<1x1x32xf32>
    %c0_20 = arith.constant 0 : index
    %c0_21 = arith.constant 0 : index
    %c0_22 = arith.constant 0 : index
    %27 = vector.load %arg7[%c0_20, %c0_21, %c0_22] : memref<1x1x32xf32, #tpu.memory_space<vmem>>, vector<1x1x32xf32>
    tpu.vector_store %arg7[%c0_20, %c0_21, %c0_22], %26 {strides = array<i32>} : memref<1x1x32xf32, #tpu.memory_space<vmem>>, vector<1x1x32xf32>,
    %c0_23 = arith.constant 0 : index
    %c0_24 = arith.constant 0 : index
    %c0_25 = arith.constant 0 : index
    %28 = vector.load %arg5[%c0_23, %c0_24, %c0_25] : memref<1x1x1xf32, #tpu.memory_space<vmem>>, vector<1x1x1xf32>
    tpu.vector_store %arg5[%c0_23, %c0_24, %c0_25], %10 {strides = array<i32>} : memref<1x1x1xf32, #tpu.memory_space<vmem>>, vector<1x1x1xf32>,
    %c0_i32_26 = arith.constant 0 : i32
    %29 = arith.cmpi eq, %arg1, %c0_i32_26 : i32
    %30 = arith.extui %29 : i1 to i32
    %c0_i32_27 = arith.constant 0 : i32
    %31 = arith.cmpi ne, %30, %c0_i32_27 : i32
    scf.if %31 {
      %c0_28 = arith.constant 0 : index
      %c0_29 = arith.constant 0 : index
      %c0_30 = arith.constant 0 : index
      %32 = vector.load %arg7[%c0_28, %c0_29, %c0_30] : memref<1x1x32xf32, #tpu.memory_space<vmem>>, vector<1x1x32xf32>
      %c0_31 = arith.constant 0 : index
      %c0_32 = arith.constant 0 : index
      %c0_33 = arith.constant 0 : index
      %33 = vector.load %arg6[%c0_31, %c0_32, %c0_33] : memref<1x1x1xf32, #tpu.memory_space<vmem>>, vector<1x1x1xf32>
      %34 = vector.broadcast %33 : vector<1x1x1xf32> to vector<1x1x32xf32>
      %35 = arith.divf %32, %34 : vector<1x1x32xf32>
      %c0_34 = arith.constant 0 : index
      %c0_35 = arith.constant 0 : index
      %c0_36 = arith.constant 0 : index
      %36 = vector.load %arg4[%c0_34, %c0_35, %c0_36] : memref<1x1x32xf32, #tpu.memory_space<vmem>>, vector<1x1x32xf32>
      tpu.vector_store %arg4[%c0_34, %c0_35, %c0_36], %35 {strides = array<i32>} : memref<1x1x32xf32, #tpu.memory_space<vmem>>, vector<1x1x32xf32>,
    } else {
    }
    return
  }
  func.func @transform_0(%arg0: i32, %arg1: i32) -> (i32, i32, i32) {
    %c0_i32 = arith.constant 0 : i32
    %c0_i32_0 = arith.constant 0 : i32
    return %arg0, %arg1, %c0_i32 : i32, i32, i32
  }
  func.func @transform_1(%arg0: i32, %arg1: i32) -> (i32, i32) {
    %c0_i32 = arith.constant 0 : i32
    %c0_i32_0 = arith.constant 0 : i32
    %c0_i32_1 = arith.constant 0 : i32
    return %c0_i32, %c0_i32_0 : i32, i32
  }
  func.func @transform_2(%arg0: i32, %arg1: i32) -> (i32, i32, i32) {
    %c0_i32 = arith.constant 0 : i32
    %c0_i32_0 = arith.constant 0 : i32
    %c0_i32_1 = arith.constant 0 : i32
    return %arg0, %c0_i32, %c0_i32_0 : i32, i32, i32
  }
}

</mosaic_0001>

<llo_original>
// kernel: tpu_custom_call.1
$region0: #{tpu_custom_call.1}
  #allocation0 [shape = 'u32[]', space=smem, size = 0x4, offset = 0x4, fixed_abs, tag = 'smem constant byte address 0x4 - core index']
  #allocation1 [shape = 'u32[72,128]{1,0:T(1,128)}', space=vmem, size = 0x9000, scoped, tag = 'internal scratch']
  #allocation2 [shape = 'f32[1,1,1]{2,1,0:T(1,128)}', space=vmem, size = 0x200, scoped, tag = 'scratch operand']
  #allocation3 [shape = 'f32[1,1,1]{2,1,0:T(1,128)}', space=vmem, size = 0x200, scoped, tag = 'scratch operand']
  #allocation4 [shape = 'f32[1,1,32]{2,1,0:T(1,128)}', space=vmem, size = 0x200, scoped, tag = 'scratch operand']
  %s0 = inlined_call_operand.hbm [shape: f32[2,8,32], index: 0, kind: input, shape index: {}]
  %s1 = inlined_call_operand.hbm [shape: f32[1,32], index: 1, kind: input, shape index: {}]
  %s2 = inlined_call_operand.hbm [shape: f32[2,1,32], index: 2, kind: output, shape index: {}]
  %s3 = sld [smem:[#allocation0]]
  $region57: #{tpu_custom_call.1} parent=0
    _
  %s5 = ssub.s32 1, %s3
  %s6 = scalar_select 0, %s5, %s3
  $region1: #{tpu_custom_call.1} parent=0
    #allocation5 [shape = 'u8[8192]{0}', space=vmem, size = 0x2000, scoped, tag = 'input window, operand 0']
    #allocation6 [shape = 's32[2]{0}', space=sflag, size = 0x8, scoped, tag = 'scoped memory for tpu_custom_call.1']
    #allocation7 [shape = 's32[2]{0}', space=sflag, size = 0x8, scoped, tag = 'scoped memory for tpu_custom_call.1']
    #allocation8 [shape = 'u8[512]{0}', space=vmem, size = 0x400, scoped, tag = 'input window, operand 1, single buffered']
    #allocation9 [shape = 's32[1]{0}', space=sflag, size = 0x4, scoped, tag = 'scoped memory for tpu_custom_call.1']
    #allocation10 [shape = 'u8[1024]{0}', space=vmem, size = 0x400, scoped, tag = 'output window, operand 0']
    %7 = vsyncpa [#allocation6], 0
    %s8 = scalar_lea.sflag [#allocation6], 1
    %9 = vsyncpa %s8, 0
    %10 = vsyncpa [#allocation9], 0
    %11 = vsyncpa [#allocation7], 0
    %s12 = scalar_lea.sflag [#allocation7], 1
    %13 = vsyncpa %s12, 0
    loop: start=0, step=1, limit=4
    $region2: #{tpu_custom_call.1} parent=1 // loop_pre_header
      _
    $region3: #{tpu_custom_call.1} parent=1 // loop_header
      %s15 = sphi 0, %s19
      %p16 = scmp.ge.s32.totalorder %s15, 4
      %s22 = sphi 0, %s34
      %s23 = sphi 0, %s30
      %s24 = sphi 0, %s22
      %s25 = sphi 0, %s23
      %s26 = sphi 0, %s24
      %s27 = sphi 0, %s25
      %s39 = sphi 0, %s41
      %s42 = sphi 0, %s39
      %s43 = sphi 0, %s42
      %s59 = sphi 0, %s43
      %s63 = sphi 0, %s63
      %s65 = sphi 0, %s63
      %s66 = sphi 0, %s65
      %s80 = sphi 0, %s66
      %s86 = sphi 0, %s88
      %s89 = sphi 0, %s86
      %s90 = sphi 0, %s89
      %s106 = sphi 0, %s90
    $region4: #{tpu_custom_call.1} parent=1 // loop_header_branch
      %18 = sbr.rel (%p16) target = $region8
    $region5: #{tpu_custom_call.1} parent=1 // loop_body
      %s20 = ssub.s32 %s15, 1
      %s21 = ssub.s32 %s15, 2
      %s28 = sadd.s32 1, %s23
      %p29 = scmp.ge.s32.totalorder %s28, 1
      %s30 = scalar_select %p29, 0, %s28
      %s31 = sadd.s32 1, %s22
      %s32 = scalar_select %p29, %s31, %s22
      %p33 = scmp.ge.s32.totalorder %s32, 2
      %s34 = scalar_select %p33, 0, %s32
      %s35 = ssub.s32 %s22, %s34
      %s36 = ssub.s32 %s23, %s30
      %s37 = sor.u32 %s35, %s36
      %p38 = scmp.eq.s32.totalorder %s37, 0
      %s40 = sadd.s32 %s39, 1
      %s41 = scalar_select %p38, %s39, %s40
      %p44 = pneg %p38
      %p45 = scmp.eq.s32.totalorder %s15, 1
      %p46 = por %p44, %p45
      %p47 = scmp.ne.s32.totalorder %s39, %s42
      %p48 = scmp.eq.s32.totalorder %s15, 0
      %p49 = por %p47, %p48
      %p50 = scmp.ne.s32.totalorder %s39, %s42
      %p51 = scmp.eq.s32.totalorder %s20, 1
      %p52 = por %p50, %p51
      %p53 = scmp.ne.s32.totalorder %s42, %s43
      %p54 = scmp.eq.s32.totalorder %s20, 0
      %p55 = por %p53, %p54
      %p56 = scmp.ne.s32.totalorder %s42, %s43
      %p57 = scmp.eq.s32.totalorder %s21, 1
      %p58 = por %p56, %p57
      %p60 = scmp.ne.s32.totalorder %s43, %s59
      %p61 = scmp.eq.s32.totalorder %s21, 0
      %p62 = por %p60, %p61
      %s64 = sadd.s32 %s63, 1
      %p67 = scmp.eq.s32.totalorder %s15, 1
      %p68 = scmp.ne.s32.totalorder %s63, %s65
      %p69 = scmp.eq.s32.totalorder %s15, 0
      %p70 = por %p68, %p69
      %p71 = scmp.ne.s32.totalorder %s63, %s65
      %p72 = scmp.eq.s32.totalorder %s20, 1
      %p73 = por %p71, %p72
      %p74 = scmp.ne.s32.totalorder %s65, %s66
      %p75 = scmp.eq.s32.totalorder %s20, 0
      %p76 = por %p74, %p75
      %p77 = scmp.ne.s32.totalorder %s65, %s66
      %p78 = scmp.eq.s32.totalorder %s21, 1
      %p79 = por %p77, %p78
      %p81 = scmp.ne.s32.totalorder %s66, %s80
      %p82 = scmp.eq.s32.totalorder %s21, 0
      %p83 = por %p81, %p82
      %s84 = ssub.s32 %s22, %s34
      %p85 = scmp.eq.s32.totalorder %s84, 0
      %s87 = sadd.s32 %s86, 1
      %s88 = scalar_select %p85, %s86, %s87
      %p91 = pneg %p85
      %p92 = scmp.eq.s32.totalorder %s15, 1
      %p93 = por %p91, %p92
      %p94 = scmp.ne.s32.totalorder %s86, %s89
      %p95 = scmp.eq.s32.totalorder %s15, 0
      %p96 = por %p94, %p95
      %p97 = scmp.ne.s32.totalorder %s86, %s89
      %p98 = scmp.eq.s32.totalorder %s20, 1
      %p99 = por %p97, %p98
      %p100 = scmp.ne.s32.totalorder %s89, %s90
      %p101 = scmp.eq.s32.totalorder %s20, 0
      %p102 = por %p100, %p101
      %p103 = scmp.ne.s32.totalorder %s89, %s90
      %p104 = scmp.eq.s32.totalorder %s21, 1
      %p105 = por %p103, %p104
      %p107 = scmp.ne.s32.totalorder %s90, %s106
      %p108 = scmp.eq.s32.totalorder %s21, 0
      %p109 = por %p107, %p108
      %p110 = scmp.le.s32.totalorder 1, %s15
      %p111 = scmp.lt.s32.totalorder %s15, 3
      %p112 = pnand %p110, %p111
      %p113 = pneg %p112
      // Predicated region
      $region9: #{tpu_custom_call.1} parent=5 // pred_check
        _
      $region10: #{tpu_custom_call.1} parent=5 // pred_check_branch
        %115 = sbr.rel (%p112) target = $region12
      $region11: #{tpu_custom_call.1} parent=5 // pred_region
        %s116 = ssub.s32 %s15, 1
        // Predicated region
        $region13: #{tpu_custom_call.1} parent=11 // pred_check
          %p117 = pneg %p76
        $region14: #{tpu_custom_call.1} parent=11 // pred_check_branch
          %119 = sbr.rel (%p117) target = $region16
        $region15: #{tpu_custom_call.1} parent=11 // pred_region
          %121 = vsyncadd [#allocation9], 0
          %s123 = sshll.u32 %s1, 4
          %s124 = int_to_ptr.hbm [resolvable:$true] %s123
          %s125 = sshll.u32 [#allocation8], 4
          %s126 = int_to_ptr.vmem [resolvable:$true] %s125
          %128 = dma.hbm_to_vmem [thread:$0]  %s124, 16, %s126, [#allocation9]
        $region16: #{tpu_custom_call.1} parent=11 // pred_fallthru
          _
      $region12: #{tpu_custom_call.1} parent=5 // pred_fallthru
        _
      %p129 = scmp.lt.s32.totalorder %s15, 2
      // Predicated region
      $region17: #{tpu_custom_call.1} parent=5 // pred_check
        %p130 = pneg %p129
      $region18: #{tpu_custom_call.1} parent=5 // pred_check_branch
        %132 = sbr.rel (%p130) target = $region20
      $region19: #{tpu_custom_call.1} parent=5 // pred_region
        // Predicated region
        $region21: #{tpu_custom_call.1} parent=19 // pred_check
          %p133 = pneg %p49
        $region22: #{tpu_custom_call.1} parent=19 // pred_check_branch
          %135 = sbr.rel (%p133) target = $region24
        $region23: #{tpu_custom_call.1} parent=19 // pred_region
          %s136 = sand.u32 %s39, 1
          %s137 = scalar_lea.sflag [#allocation6], %s136
          %s138 = sand.u32 %s39, 1
          %s139 = smul.addr %s138, 8
          %s140 = scalar_lea.vmem [#allocation5], %s139
          %142 = vsyncadd %s137, 0
          %s143 = sadd.s32 %s23, %s22
          %s144 = smul.addr %s143, 8
          %s145 = scalar_lea.hbm %s0, %s144
          %s147 = sshll.u32 %s145, 4
          %s148 = int_to_ptr.hbm [resolvable:$true] %s147
          %s149 = sshll.u32 %s140, 4
          %s150 = int_to_ptr.vmem [resolvable:$true] %s149
          %152 = dma.hbm_to_vmem [thread:$0]  %s148, 128, %s150, %s137
        $region24: #{tpu_custom_call.1} parent=19 // pred_fallthru
          _
      $region20: #{tpu_custom_call.1} parent=5 // pred_fallthru
        _
      %p153 = scmp.le.s32.totalorder 1, %s15
      %p154 = scmp.lt.s32.totalorder %s15, 3
      %p155 = pnand %p153, %p154
      %p156 = pneg %p155
      // Predicated region
      $region25: #{tpu_custom_call.1} parent=5 // pred_check
        _
      $region26: #{tpu_custom_call.1} parent=5 // pred_check_branch
        %158 = sbr.rel (%p155) target = $region28
      $region27: #{tpu_custom_call.1} parent=5 // pred_region
        %s159 = ssub.s32 %s15, 1
        %s160 = sand.u32 %s42, 1
        %s161 = scalar_lea.sflag [#allocation6], %s160
        %s162 = sand.u32 %s42, 1
        %s163 = smul.addr %s162, 8
        %s164 = scalar_lea.vmem [#allocation5], %s163
        // Predicated region
        $region29: #{tpu_custom_call.1} parent=27 // pred_check
          %p165 = pneg %p55
        $region30: #{tpu_custom_call.1} parent=27 // pred_check_branch
          %167 = sbr.rel (%p165) target = $region32
        $region31: #{tpu_custom_call.1} parent=27 // pred_region
          %169 = dma.done %s161, 128
        $region32: #{tpu_custom_call.1} parent=27 // pred_fallthru
          _
        // Predicated region
        $region33: #{tpu_custom_call.1} parent=27 // pred_check
          %p170 = pneg %p76
        $region34: #{tpu_custom_call.1} parent=27 // pred_check_branch
          %172 = sbr.rel (%p170) target = $region36
        $region35: #{tpu_custom_call.1} parent=27 // pred_region
          %174 = dma.done [#allocation9], 16
        $region36: #{tpu_custom_call.1} parent=27 // pred_fallthru
          _
        %s175 = sand.u32 %s42, 1
        %s176 = scalar_lea.sflag [#allocation6], %s175
        %s177 = sand.u32 %s42, 1
        %s178 = smul.addr %s177, 8
        %s179 = scalar_lea.vmem [#allocation5], %s178
        %p180 = pneg %p55
        %p181 = pneg %p52
        %p182 = pneg %p76
        %p183 = pneg %p73
        %p184 = pneg %p102
        %p185 = pneg %p99
        %s186 = sand.u32 %s89, 1
        %s187 = scalar_lea.sflag [#allocation7], %s186
        %s188 = sand.u32 %s89, 1
        %s189 = scalar_lea.vmem [#allocation10], %s188
        %p190 = scmp.eq.s32.totalorder %s25, 0
        // Predicated region
        $region37: #{tpu_custom_call.1} parent=27 // pred_check
          %p191 = pneg %p190
        $region38: #{tpu_custom_call.1} parent=27 // pred_check_branch
          %193 = sbr.rel (%p191) target = $region40
        $region39: #{tpu_custom_call.1} parent=27 // pred_region
          %vm194 = vcmask 0
          %195 = vst.msk [vmem:[#allocation2] sm:$0x1] %vm194, -inf
          %196 = vst.msk [vmem:[#allocation3] sm:$0x1] %vm194, 0.0
          %vm197 = vcmask 253952
          %198 = vst.msk [vmem:[#allocation4] sm:$0x1] %vm197, 0.0
        $region40: #{tpu_custom_call.1} parent=27 // pred_fallthru
          _
        %v199 = vld [vmem:[%s164] sm:$0xff]
        %v200 = vld [vmem:[#allocation8] sm:$0x1]
        %vm201 = vcmask 261120
        %v203 = vsel %vm201, %v200, 0
        %v206 = vsel %vm201, %v199, 0
        %208 = vmatpush.xpose.msra.mxu0 0.0
        %209 = vmatpush.xpose.msra.mxu0 0.0
        %210 = vmatpush.xpose.msra.mxu0 0.0
        %211 = vmatpush.xpose.msra.mxu0 0.0
        %212 = vmatpush.xpose.msra.mxu0 0.0
        %213 = vmatpush.xpose.msra.mxu0 0.0
        %214 = vmatpush.xpose.msra.mxu0 0.0
        %215 = vmatpush.xpose.msra.mxu0 0.0
        %216 = vmatpush.xpose.msra.mxu0 0.0
        %217 = vmatpush.xpose.msra.mxu0 0.0
        %218 = vmatpush.xpose.msra.mxu0 0.0
        %219 = vmatpush.xpose.msra.mxu0 0.0
        %220 = vmatpush.xpose.msra.mxu0 0.0
        %221 = vmatpush.xpose.msra.mxu0 0.0
        %222 = vmatpush.xpose.msra.mxu0 0.0
        %223 = vmatpush.xpose.msra.mxu0 %v206
        %224 = vmatmul.f32.gmra.mxu0 %v203
        %v225 = vpop.f32.mrf.mxu0
        %v226 = vadd.f32 0.0, %v225
        %227 = vdwg.mxu0
        %v228 = vld [vmem:[#allocation2] sm:$0x1]
        %vm229 = vcmask 57344
        %v230 = vsel %vm229, %v226, -inf
        %231 = vmax.xlane.f32.xlu0 %v230
        %v232 = vpop.xlane.xlu0 %231
        %v233 = vmax.f32 %v228, %v232
        %v234 = vsub.f32 %v228, %v233
        %v235 = vmul.f32 %v234, 1.442695
        %v236 = vpow.pop %v235
        %238 = vset.pattern.permute.xlu0 0
        %239 = vperm.xlu0 %238, %v233
        %v240 = vpop.permute.xlu0 %239
        %v242 = vperm.slane %v240, 0
        %v243 = vsub.f32 %v226, %v242
        %v244 = vmul.f32 %v243, 1.442695
        %v245 = vpow.pop %v244
        %v246 = vld [vmem:[#allocation3] sm:$0x1]
        %v247 = vmul.f32 %v236, %v246
        %v248 = vsel %vm229, %v245, 0.0
        %249 = vadd.xlane.f32.xlu0 %v248
        %v250 = vpop.xlane.xlu0 %249
        %v251 = vadd.f32 %v247, %v250
        %vm252 = vcmask 0
        %253 = vst.msk [vmem:[#allocation3] sm:$0x1] %vm252, %v251
        %v254 = vld [vmem:[#allocation4] sm:$0x1]
        %256 = vset.pattern.permute.xlu0 0
        %257 = vperm.xlu0 %256, %v236
        %v258 = vpop.permute.xlu0 %257
        %v260 = vperm.slane %v258, 0
        %v261 = vmul.f32 %v260, %v254
        %vm262 = vcmask 64512
        %v264 = vsel %vm262, %v245, 0
        %266 = vmatpush.msra.mxu0 0.0
        %267 = vmatpush.msra.mxu0 0.0
        %268 = vmatpush.msra.mxu0 0.0
        %269 = vmatpush.msra.mxu0 0.0
        %270 = vmatpush.msra.mxu0 0.0
        %271 = vmatpush.msra.mxu0 0.0
        %272 = vmatpush.msra.mxu0 0.0
        %273 = vmatpush.msra.mxu0 0.0
        %274 = vmatpush.msra.mxu0 0.0
        %275 = vmatpush.msra.mxu0 0.0
        %276 = vmatpush.msra.mxu0 0.0
        %277 = vmatpush.msra.mxu0 0.0
        %278 = vmatpush.msra.mxu0 0.0
        %279 = vmatpush.msra.mxu0 0.0
        %280 = vmatpush.msra.mxu0 0.0
        %281 = vmatpush.msra.mxu0 %v199
        %282 = vmatmul.f32.gmra.mxu0 %v264
        %v283 = vpop.f32.mrf.mxu0
        %v284 = vadd.f32 0.0, %v283
        %285 = vdwg.mxu0
        %v286 = vadd.f32 %v261, %v284
        %vm287 = vcmask 253952
        %288 = vst.msk [vmem:[#allocation4] sm:$0x1] %vm287, %v286
        %289 = vst.msk [vmem:[#allocation2] sm:$0x1] %vm252, %v233
        // Predicated region
        $region41: #{tpu_custom_call.1} parent=27 // pred_check
          %p290 = pneg %p190
        $region42: #{tpu_custom_call.1} parent=27 // pred_check_branch
          %292 = sbr.rel (%p290) target = $region44
        $region43: #{tpu_custom_call.1} parent=27 // pred_region
          %v293 = vld [vmem:[#allocation4] sm:$0x1]
          %v294 = vld [vmem:[#allocation3] sm:$0x1]
          %296 = vset.pattern.permute.xlu0 0
          %297 = vperm.xlu0 %296, %v294
          %v298 = vpop.permute.xlu0 %297
          %v300 = vperm.slane %v298, 0
          %v301 = vrcp.pop %v300
          %v302 = vmul.f32 %v300, %v301
          %v303 = vsub.f32 1.0, %v302
          %v304 = vmul.f32 %v301, %v303
          %v305 = vadd.f32 %v301, %v304
          %vm306 = vweird.f32 %v300
          %vm307 = vweird.f32 %v301
          %vm308 = vmor %vm306, %vm307
          %v309 = vsel %vm308, %v301, %v305
          %v310 = vand.u32 2147483647, %v300
          %vm311 = vcmp.eq.f32.partialorder %v310, 8.507059e+37
          %v312 = vand.u32 %v300, 2147483648
          %v313 = vor.u32 1.1754944e-38, %v312
          %v314 = vsel %vm311, %v313, %v309
          %v315 = vmul.f32 %v293, %v314
          %316 = vst.msk [vmem:[%s189] sm:$0x1] %vm287, %v315
        $region44: #{tpu_custom_call.1} parent=27 // pred_fallthru
          _
        %s317 = sand.u32 %s89, 1
        %s318 = scalar_lea.sflag [#allocation7], %s317
        %s319 = sand.u32 %s89, 1
        %s320 = scalar_lea.vmem [#allocation10], %s319
        // Predicated region
        $region45: #{tpu_custom_call.1} parent=27 // pred_check
          %p321 = pneg %p99
        $region46: #{tpu_custom_call.1} parent=27 // pred_check_branch
          %323 = sbr.rel (%p321) target = $region48
        $region47: #{tpu_custom_call.1} parent=27 // pred_region
          %325 = vsyncadd %s318, 0
          %s326 = scalar_lea.hbm %s2, %s24
          %s328 = sshll.u32 %s320, 4
          %s329 = int_to_ptr.vmem [resolvable:$true] %s328
          %s330 = sshll.u32 %s326, 4
          %s331 = int_to_ptr.hbm [resolvable:$true] %s330
          %333 = dma.vmem_to_hbm [thread:$0]  %s329, 16, %s331, %s318
        $region48: #{tpu_custom_call.1} parent=27 // pred_fallthru
          _
      $region28: #{tpu_custom_call.1} parent=5 // pred_fallthru
        _
      %p334 = scmp.le.s32.totalorder 2, %s15
      // Predicated region
      $region49: #{tpu_custom_call.1} parent=5 // pred_check
        %p335 = pneg %p334
      $region50: #{tpu_custom_call.1} parent=5 // pred_check_branch
        %337 = sbr.rel (%p335) target = $region52
      $region51: #{tpu_custom_call.1} parent=5 // pred_region
        %s338 = ssub.s32 %s15, 2
        // Predicated region
        $region53: #{tpu_custom_call.1} parent=51 // pred_check
          %p339 = pneg %p105
        $region54: #{tpu_custom_call.1} parent=51 // pred_check_branch
          %341 = sbr.rel (%p339) target = $region56
        $region55: #{tpu_custom_call.1} parent=51 // pred_region
          %s342 = sand.u32 %s90, 1
          %s343 = scalar_lea.sflag [#allocation7], %s342
          %s344 = sand.u32 %s90, 1
          %s345 = scalar_lea.vmem [#allocation10], %s344
          %347 = dma.done %s343, 16
        $region56: #{tpu_custom_call.1} parent=51 // pred_fallthru
          _
      $region52: #{tpu_custom_call.1} parent=5 // pred_fallthru
        _
    $region6: #{tpu_custom_call.1} parent=1 // loop_footer
      %s19 = sadd.s32 1, %s15
    $region7: #{tpu_custom_call.1} parent=1 // loop_footer_branch
      %14 = sbr.rel target = $region3
    $region8: #{tpu_custom_call.1} parent=1 // loop_exit
      _
    %348 = vsyncpa [#allocation6], 1
    %s349 = scalar_lea.sflag [#allocation6], 1
    %350 = vsyncpa %s349, 1
    %351 = vsyncpa [#allocation9], 1
    %352 = vsyncpa [#allocation7], 1
    %s353 = scalar_lea.sflag [#allocation7], 1
    %354 = vsyncpa %s353, 1

</llo_original>
